<compile_context>
chip_gen: v5e
topology: v5e:2x2
jax: 0.10.0
libtpu: 0.0.40
codegen_flags: <defaults>
</compile_context>

<pallas_src>
import functools

import jax
import jax.numpy as jnp
from jax.experimental import pallas as pl
from jax.experimental.pallas import tpu as pltpu


def _round_up(x, m):
    return (x + m - 1) // m * m


# --------------------------------------------------------------------------- #
# Kernel
# --------------------------------------------------------------------------- #
def temporal_block_kernel(x_ref, w1_ref, w2_ref, t1_ref, t2_ref, *rest,
                          K, dilation, padding, L, Lp, Nb, out_ch,
                          has_downsample):
    if has_downsample:
        wd_ref, bd_ref, out_ref = rest
    else:
        (out_ref,) = rest

    nbl = Nb * Lp
    x = x_ref[...]                                     # (C1p, Nb*Lp) f32

    # Lane position within each length-Lp batch segment; zeroes the causal
    # left-pad region after the lane roll (and kills the roll wrap-around).
    lane = jax.lax.broadcasted_iota(jnp.int32, (1, nbl), 1)
    lpos = lane % Lp if Nb > 1 else lane

    def causal_windows(a):
        # a: (C, Nb*Lp) f32.  Rows [k*C:(k+1)*C] of the result hold `a`
        # shifted right by (K-1-k)*dilation within each batch segment with
        # zero fill (the causal pad), i.e. the tap-k window of the dilated
        # conv.  Rolls run on the XLU, the mask on the VPU; the result feeds
        # a single MXU dot.
        pieces = []
        for k in range(K):
            s = padding - k * dilation
            if s == 0:
                piece = a
            elif s >= L:
                piece = jnp.zeros_like(a)              # window fully in the pad
            else:
                piece = jnp.where(lpos < s, 0.0, pltpu.roll(a, s, axis=1))
            pieces.append(piece)
        return jnp.concatenate(pieces, axis=0).astype(jnp.bfloat16)

    # conv1 + bias + BN1 (scale folded into w1, bias/stats in t1) + ReLU.
    h1 = jnp.dot(w1_ref[...], causal_windows(x),
                 preferred_element_type=jnp.float32) + t1_ref[...]
    h1 = jnp.maximum(h1, 0.0)                 # (C2p, Nb*Lp); padded rows stay 0
    # dropout1: eval-mode identity.

    # conv2 + bias + BN2 + ReLU.
    h2 = jnp.dot(w2_ref[...], causal_windows(h1),
                 preferred_element_type=jnp.float32) + t2_ref[...]
    h2 = jnp.maximum(h2, 0.0)                 # (out_ch, Nb*Lp)
    # dropout2: eval-mode identity.

    # Residual path.
    if has_downsample:
        res = jnp.dot(wd_ref[...], x.astype(jnp.bfloat16),
                      preferred_element_type=jnp.float32) + bd_ref[...]
    else:
        res = x[:out_ch, :]                   # identity residual, exact f32

    out_ref[...] = jnp.maximum(h2 + res, 0.0)


# --------------------------------------------------------------------------- #
# Wrapper
# --------------------------------------------------------------------------- #
def _choose_batch_tile(N, Lp, C1p, C2p, out_ch, K):
    """Largest batch tile whose per-step VMEM footprint fits the budget,
    preferring >=4 (else >=2) grid steps for pipelining / both v7x cores."""
    divisors = [d for d in range(1, N + 1) if N % d == 0]

    def step_bytes(d):
        nbl = d * Lp
        b = 2 * C1p * nbl * 4                      # x block, double buffered
        b += 2 * out_ch * nbl * 4                  # out block, double buffered
        b += K * (C1p + C2p) * nbl * 2             # bf16 im2col matrices
        b += 2 * C2p * nbl * 4                     # h1 / h2 f32 intermediates
        b += 4 * (C2p * K * C1p + out_ch * K * C2p)  # bf16 weights, 2 buffers
        return b

    fitting = [d for d in divisors if step_bytes(d) <= 24 * 1024 * 1024]
    if not fitting:
        # TODO(synk): add an L-tiled grid axis with a `padding`-column halo for
        # configurations whose single-element footprint exceeds the budget.
        fitting = [1]
    for min_steps in (4, 2, 1):
        pick = [d for d in fitting if N // d >= min_steps]
        if pick:
            return max(pick)
    return max(fitting)


def temporal_block_forward(x, params, *, kernel_size, stride, dilation,
                           padding, eps=1e-5):
    """Eval-mode TemporalBlock forward.  x: (N, C_in, L) f32 -> (N, out_ch, L)."""
    assert stride == 1, "causal TemporalBlock uses stride=1"
    N, C_in, L = x.shape
    K = kernel_size
    out_ch = params["w1"].shape[0]
    assert padding == (K - 1) * dilation, "padding must be (K-1)*dilation"

    C1p = _round_up(C_in, 16)        # 16: bf16 sublane packing alignment
    C2p = _round_up(out_ch, 16)
    Lp = _round_up(L, 128)           # 128: lane-dense blocks / unmasked stores

    # ---- fold conv bias + eval BatchNorm into (weight scale, shift) --------
    def fold(b, g, beta, m, v):
        s = g / jnp.sqrt(v + eps)
        return s, beta + s * (b - m)

    s1, t1 = fold(params["b1"], params["g1"], params["beta1"],
                  params["m1"], params["v1"])
    s2, t2 = fold(params["b2"], params["g2"], params["beta2"],
                  params["m2"], params["v2"])

    # ---- stack the K taps into one (cout_p, K*cin_p) bf16 matrix per conv --
    def stack_taps(w, scale, cin_p, cout_p):
        oc, c, k = w.shape
        wt = jnp.transpose(w * scale[:, None, None], (0, 2, 1))   # (oc, K, c)
        wt = jnp.pad(wt, ((0, cout_p - oc), (0, 0), (0, cin_p - c)))
        return wt.reshape(cout_p, k * cin_p).astype(jnp.bfloat16)

    w1s = stack_taps(params["w1"], s1, C1p, C2p)      # (C2p, K*C1p)
    w2s = stack_taps(params["w2"], s2, C2p, out_ch)   # (out_ch, K*C2p)
    t1p = jnp.pad(t1, (0, C2p - out_ch)).reshape(C2p, 1).astype(jnp.float32)
    t2p = t2.reshape(out_ch, 1).astype(jnp.float32)

    has_downsample = params.get("wd") is not None
    if not has_downsample:
        assert C_in == out_ch, "identity residual requires in_ch == out_ch"

    # ---- lane-dense activation layout: (N, C, L) -> (C1p, N*Lp) ------------
    x = x.astype(jnp.float32)
    if Lp > L:
        x = jnp.pad(x, ((0, 0), (0, 0), (0, Lp - L)))
    x_t = jnp.transpose(x, (1, 0, 2)).reshape(C_in, N * Lp)
    if C1p > C_in:
        x_t = jnp.pad(x_t, ((0, C1p - C_in), (0, 0)))

    Nb = _choose_batch_tile(N, Lp, C1p, C2p, out_ch, K)
    nbl = Nb * Lp

    kernel = functools.partial(
        temporal_block_kernel, K=K, dilation=dilation, padding=padding,
        L=L, Lp=Lp, Nb=Nb, out_ch=out_ch, has_downsample=has_downsample)

    # Weight/shift inputs use constant index maps, so Pallas fetches them once
    # and revisits them every step (pl.Buffered(1) could drop their second
    # buffer; left at the default for compatibility).
    in_specs = [
        pl.BlockSpec((C1p, nbl), lambda n: (0, n)),          # x
        pl.BlockSpec((C2p, K * C1p), lambda n: (0, 0)),      # w1 (taps fused)
        pl.BlockSpec((out_ch, K * C2p), lambda n: (0, 0)),   # w2 (taps fused)
        pl.BlockSpec((C2p, 1), lambda n: (0, 0)),            # t1
        pl.BlockSpec((out_ch, 1), lambda n: (0, 0)),         # t2
    ]
    args = [x_t, w1s, w2s, t1p, t2p]
    if has_downsample:
        wd = jnp.pad(params["wd"][:, :, 0],
                     ((0, 0), (0, C1p - C_in))).astype(jnp.bfloat16)
        bd = params["bd"].reshape(out_ch, 1).astype(jnp.float32)
        in_specs += [pl.BlockSpec((out_ch, C1p), lambda n: (0, 0)),
                     pl.BlockSpec((out_ch, 1), lambda n: (0, 0))]
        args += [wd, bd]

    grid_spec = pltpu.PrefetchScalarGridSpec(
        num_scalar_prefetch=0,
        grid=(N // Nb,),
        in_specs=in_specs,
        out_specs=pl.BlockSpec((out_ch, nbl), lambda n: (0, n)),
    )

    out_t = pl.pallas_call(
        kernel,
        out_shape=jax.ShapeDtypeStruct((out_ch, N * Lp), jnp.float32),
        grid_spec=grid_spec,
        compiler_params=pltpu.CompilerParams(
            dimension_semantics=("parallel",),       # batch tiles -> both TCs
            vmem_limit_bytes=48 * 1024 * 1024,       # > v5e 16 MiB default,
        ),                                           # < v7x 64 MiB physical
    )(*args)

    out = out_t.reshape(out_ch, N, Lp)[:, :, :L]
    return jnp.transpose(out, (1, 0, 2))


# --------------------------------------------------------------------------- #
# Pure-JAX reference (eval-mode module semantics) for correctness checking
# --------------------------------------------------------------------------- #
def _ref_forward(x, params, *, dilation, padding, eps=1e-5):
    def conv1d(inp, w, b, dil):
        dn = jax.lax.conv_dimension_numbers(inp.shape, w.shape,
                                            ("NCH", "OIH", "NCH"))
        y = jax.lax.conv_general_dilated(inp, w, window_strides=(1,),
                                         padding="VALID", rhs_dilation=(dil,),
                                         dimension_numbers=dn)
        return y + b[None, :, None]

    def bn(inp, g, beta, m, v):
        return g[None, :, None] * (inp - m[None, :, None]) / \
            jnp.sqrt(v[None, :, None] + eps) + beta[None, :, None]

    def cpad(inp):
        return jnp.pad(inp, ((0, 0), (0, 0), (padding, 0)))

    out = jax.nn.relu(bn(conv1d(cpad(x), params["w1"], params["b1"], dilation),
                         params["g1"], params["beta1"], params["m1"],
                         params["v1"]))
    out = jax.nn.relu(bn(conv1d(cpad(out), params["w2"], params["b2"], dilation),
                         params["g2"], params["beta2"], params["m2"],
                         params["v2"]))
    if params.get("wd") is not None:
        res = conv1d(x, params["wd"], params["bd"], 1)
    else:
        res = x
    return jax.nn.relu(out + res)


# --------------------------------------------------------------------------- #
# Self-test
# --------------------------------------------------------------------------- #
if __name__ == "__main__":
    root = jax.random.PRNGKey(0)
    ks = jax.random.split(root, 48)

    def make_params(keys, in_ch, out_ch, K, downsample):
        p = {
            "w1": 0.2 * jax.random.normal(keys[0], (out_ch, in_ch, K), jnp.float32),
            "b1": 0.1 * jax.random.normal(keys[1], (out_ch,), jnp.float32),
            "g1": jax.random.uniform(keys[2], (out_ch,), jnp.float32, 0.5, 1.5),
            "beta1": 0.1 * jax.random.normal(keys[3], (out_ch,), jnp.float32),
            "m1": 0.1 * jax.random.normal(keys[4], (out_ch,), jnp.float32),
            "v1": jax.random.uniform(keys[5], (out_ch,), jnp.float32, 0.5, 1.5),
            "w2": 0.2 * jax.random.normal(keys[6], (out_ch, out_ch, K), jnp.float32),
            "b2": 0.1 * jax.random.normal(keys[7], (out_ch,), jnp.float32),
            "g2": jax.random.uniform(keys[8], (out_ch,), jnp.float32, 0.5, 1.5),
            "beta2": 0.1 * jax.random.normal(keys[9], (out_ch,), jnp.float32),
            "m2": 0.1 * jax.random.normal(keys[10], (out_ch,), jnp.float32),
            "v2": jax.random.uniform(keys[11], (out_ch,), jnp.float32, 0.5, 1.5),
            "wd": None, "bd": None,
        }
        if downsample:
            p["wd"] = 0.2 * jax.random.normal(keys[12], (out_ch, in_ch, 1), jnp.float32)
            p["bd"] = 0.1 * jax.random.normal(keys[13], (out_ch,), jnp.float32)
        return p

    def run_case(pkeys, xkey, *, N, C_in, out_ch, L, K, dil, downsample):
        pad = (K - 1) * dil
        params = make_params(pkeys, C_in, out_ch, K, downsample)
        x = jax.random.normal(xkey, (N, C_in, L), jnp.float32)
        out = jax.block_until_ready(
            temporal_block_forward(x, params, kernel_size=K, stride=1,
                                   dilation=dil, padding=pad))
        ref = _ref_forward(x, params, dilation=dil, padding=pad)
        assert out.shape == (N, out_ch, L)
        err = jnp.max(jnp.abs(out - ref))
        # bf16 MXU operands (f32 accumulation) => looser tolerance than pure f32.
        assert jnp.allclose(out, ref, rtol=5e-2, atol=5e-2), \
            f"max abs err = {err}"

    # 1) downsample residual (in_ch != out_ch), dilation=2.
    run_case(ks[0:14], ks[42], N=2, C_in=4, out_ch=8, L=16, K=3, dil=2,
             downsample=True)
    # 2) identity residual (in_ch == out_ch), dilation=1.
    run_case(ks[14:28], ks[43], N=2, C_in=8, out_ch=8, L=16, K=3, dil=1,
             downsample=False)
    # 3) multi-element batch tile + multi-step grid (exercises the per-segment
    #    pad mask across batch elements), dilation=2.
    run_case(ks[28:42], ks[44], N=8, C_in=8, out_ch=16, L=48, K=3, dil=2,
             downsample=True)

    print("KERNEL_OK")
</pallas_src>

<mosaic_0001>
module attributes {stable_mosaic.version = 11 : i64} {
  func.func @temporal_block_kernel(%arg0: i32, %arg1: memref<16x128xf32, #tpu.memory_space<vmem>>, %arg2: memref<16x48xbf16, #tpu.memory_space<vmem>>, %arg3: memref<8x48xbf16, #tpu.memory_space<vmem>>, %arg4: memref<16x1xf32, #tpu.memory_space<vmem>>, %arg5: memref<8x1xf32, #tpu.memory_space<vmem>>, %arg6: memref<8x16xbf16, #tpu.memory_space<vmem>>, %arg7: memref<8x1xf32, #tpu.memory_space<vmem>>, %arg8: memref<8x128xf32, #tpu.memory_space<vmem>>) attributes {dimension_semantics = [#tpu.dimension_semantics<parallel>], iteration_bounds = array<i64: 2>, scalar_prefetch = 0 : i64, scratch_operands = 0 : i64, tpu.core_type = #tpu.core_type<tc>, window_params = [{transform_indices = @transform_0, window_bounds = array<i64: 16, 128>}, {pipeline_mode = #tpu.pipeline_mode<synchronous>, transform_indices = @transform_1, window_bounds = array<i64: 16, 48>}, {pipeline_mode = #tpu.pipeline_mode<synchronous>, transform_indices = @transform_2, window_bounds = array<i64: 8, 48>}, {pipeline_mode = #tpu.pipeline_mode<synchronous>, transform_indices = @transform_3, window_bounds = array<i64: 16, 1>}, {pipeline_mode = #tpu.pipeline_mode<synchronous>, transform_indices = @transform_4, window_bounds = array<i64: 8, 1>}, {pipeline_mode = #tpu.pipeline_mode<synchronous>, transform_indices = @transform_5, window_bounds = array<i64: 8, 16>}, {pipeline_mode = #tpu.pipeline_mode<synchronous>, transform_indices = @transform_6, window_bounds = array<i64: 8, 1>}, {transform_indices = @transform_7, window_bounds = array<i64: 8, 128>}]} {
    %c0 = arith.constant 0 : index
    %c0_0 = arith.constant 0 : index
    %0 = vector.load %arg1[%c0, %c0_0] : memref<16x128xf32, #tpu.memory_space<vmem>>, vector<16x128xf32>
    %1 = tpu.iota {dimensions = array<i32: 1>} : vector<1x128xi32>
    %c0_1 = arith.constant 0 : index
    %c0_2 = arith.constant 0 : index
    %2 = vector.load %arg2[%c0_1, %c0_2] : memref<16x48xbf16, #tpu.memory_space<vmem>>, vector<16x48xbf16>
    %c4_i32 = arith.constant 4 : i32
    %3 = vector.broadcast %c4_i32 : i32 to vector<1x128xi32>
    %4 = arith.cmpi slt, %1, %3 : vector<1x128xi32>
    %c4_i32_3 = arith.constant 4 : i32
    %5 = tpu.dynamic_rotate %0 by %c4_i32_3 dim 1 : vector<16x128xf32>, i32 -> vector<16x128xf32>
    %cst = arith.constant 0.000000e+00 : f32
    %6 = vector.shape_cast %4 : vector<1x128xi1> to vector<1x128xi1>
    %7 = vector.broadcast %6 : vector<1x128xi1> to vector<16x128xi1>
    %8 = vector.broadcast %cst : f32 to vector<16x128xf32>
    %9 = arith.select %7, %8, %5 : vector<16x128xi1>, vector<16x128xf32>
    %c2_i32 = arith.constant 2 : i32
    %10 = vector.broadcast %c2_i32 : i32 to vector<1x128xi32>
    %11 = arith.cmpi slt, %1, %10 : vector<1x128xi32>
    %c2_i32_4 = arith.constant 2 : i32
    %12 = tpu.dynamic_rotate %0 by %c2_i32_4 dim 1 : vector<16x128xf32>, i32 -> vector<16x128xf32>
    %cst_5 = arith.constant 0.000000e+00 : f32
    %13 = vector.shape_cast %11 : vector<1x128xi1> to vector<1x128xi1>
    %14 = vector.broadcast %13 : vector<1x128xi1> to vector<16x128xi1>
    %15 = vector.broadcast %cst_5 : f32 to vector<16x128xf32>
    %16 = arith.select %14, %15, %12 : vector<16x128xi1>, vector<16x128xf32>
    %17 = tpu.concatenate %9, %16, %0 in 0 : vector<16x128xf32>, vector<16x128xf32>, vector<16x128xf32> -> vector<48x128xf32>
    %18 = arith.truncf %17 : vector<48x128xf32> to vector<48x128xbf16>
    %cst_6 = arith.constant dense<0.000000e+00> : vector<16x128xf32>
    %19 = tpu.matmul %2, %18, %cst_6 {dimension_numbers = #tpu.dot_dimension_numbers<[1], [0], [0], [1], [0, 0, 1, 1], [], []>} : vector<16x48xbf16>, vector<48x128xbf16>, vector<16x128xf32> -> vector<16x128xf32>
    %c0_7 = arith.constant 0 : index
    %c0_8 = arith.constant 0 : index
    %20 = vector.load %arg4[%c0_7, %c0_8] : memref<16x1xf32, #tpu.memory_space<vmem>>, vector<16x1xf32>
    %21 = vector.broadcast %20 : vector<16x1xf32> to vector<16x128xf32>
    %22 = arith.addf %19, %21 : vector<16x128xf32>
    %cst_9 = arith.constant 0.000000e+00 : f32
    %23 = vector.broadcast %cst_9 : f32 to vector<16x128xf32>
    %24 = arith.maximumf %22, %23 : vector<16x128xf32>
    %c0_10 = arith.constant 0 : index
    %c0_11 = arith.constant 0 : index
    %25 = vector.load %arg3[%c0_10, %c0_11] : memref<8x48xbf16, #tpu.memory_space<vmem>>, vector<8x48xbf16>
    %c4_i32_12 = arith.constant 4 : i32
    %26 = vector.broadcast %c4_i32_12 : i32 to vector<1x128xi32>
    %27 = arith.cmpi slt, %1, %26 : vector<1x128xi32>
    %c4_i32_13 = arith.constant 4 : i32
    %28 = tpu.dynamic_rotate %24 by %c4_i32_13 dim 1 : vector<16x128xf32>, i32 -> vector<16x128xf32>
    %cst_14 = arith.constant 0.000000e+00 : f32
    %29 = vector.shape_cast %27 : vector<1x128xi1> to vector<1x128xi1>
    %30 = vector.broadcast %29 : vector<1x128xi1> to vector<16x128xi1>
    %31 = vector.broadcast %cst_14 : f32 to vector<16x128xf32>
    %32 = arith.select %30, %31, %28 : vector<16x128xi1>, vector<16x128xf32>
    %c2_i32_15 = arith.constant 2 : i32
    %33 = vector.broadcast %c2_i32_15 : i32 to vector<1x128xi32>
    %34 = arith.cmpi slt, %1, %33 : vector<1x128xi32>
    %c2_i32_16 = arith.constant 2 : i32
    %35 = tpu.dynamic_rotate %24 by %c2_i32_16 dim 1 : vector<16x128xf32>, i32 -> vector<16x128xf32>
    %cst_17 = arith.constant 0.000000e+00 : f32
    %36 = vector.shape_cast %34 : vector<1x128xi1> to vector<1x128xi1>
    %37 = vector.broadcast %36 : vector<1x128xi1> to vector<16x128xi1>
    %38 = vector.broadcast %cst_17 : f32 to vector<16x128xf32>
    %39 = arith.select %37, %38, %35 : vector<16x128xi1>, vector<16x128xf32>
    %40 = tpu.concatenate %32, %39, %24 in 0 : vector<16x128xf32>, vector<16x128xf32>, vector<16x128xf32> -> vector<48x128xf32>
    %41 = arith.truncf %40 : vector<48x128xf32> to vector<48x128xbf16>
    %cst_18 = arith.constant dense<0.000000e+00> : vector<8x128xf32>
    %42 = tpu.matmul %25, %41, %cst_18 {dimension_numbers = #tpu.dot_dimension_numbers<[1], [0], [0], [1], [0, 0, 1, 1], [], []>} : vector<8x48xbf16>, vector<48x128xbf16>, vector<8x128xf32> -> vector<8x128xf32>
    %c0_19 = arith.constant 0 : index
    %c0_20 = arith.constant 0 : index
    %43 = vector.load %arg5[%c0_19, %c0_20] : memref<8x1xf32, #tpu.memory_space<vmem>>, vector<8x1xf32>
    %44 = vector.broadcast %43 : vector<8x1xf32> to vector<8x128xf32>
    %45 = arith.addf %42, %44 : vector<8x128xf32>
    %cst_21 = arith.constant 0.000000e+00 : f32
    %46 = vector.broadcast %cst_21 : f32 to vector<8x128xf32>
    %47 = arith.maximumf %45, %46 : vector<8x128xf32>
    %c0_22 = arith.constant 0 : index
    %c0_23 = arith.constant 0 : index
    %48 = vector.load %arg6[%c0_22, %c0_23] : memref<8x16xbf16, #tpu.memory_space<vmem>>, vector<8x16xbf16>
    %49 = arith.truncf %0 : vector<16x128xf32> to vector<16x128xbf16>
    %cst_24 = arith.constant dense<0.000000e+00> : vector<8x128xf32>
    %50 = tpu.matmul %48, %49, %cst_24 {dimension_numbers = #tpu.dot_dimension_numbers<[1], [0], [0], [1], [0, 0, 1, 1], [], []>} : vector<8x16xbf16>, vector<16x128xbf16>, vector<8x128xf32> -> vector<8x128xf32>
    %c0_25 = arith.constant 0 : index
    %c0_26 = arith.constant 0 : index
    %51 = vector.load %arg7[%c0_25, %c0_26] : memref<8x1xf32, #tpu.memory_space<vmem>>, vector<8x1xf32>
    %52 = vector.broadcast %51 : vector<8x1xf32> to vector<8x128xf32>
    %53 = arith.addf %50, %52 : vector<8x128xf32>
    %54 = arith.addf %47, %53 : vector<8x128xf32>
    %cst_27 = arith.constant 0.000000e+00 : f32
    %55 = vector.broadcast %cst_27 : f32 to vector<8x128xf32>
    %56 = arith.maximumf %54, %55 : vector<8x128xf32>
    %c0_28 = arith.constant 0 : index
    %c0_29 = arith.constant 0 : index
    %57 = vector.load %arg8[%c0_28, %c0_29] : memref<8x128xf32, #tpu.memory_space<vmem>>, vector<8x128xf32>
    tpu.vector_store %arg8[%c0_28, %c0_29], %56 {strides = array<i32>} : memref<8x128xf32, #tpu.memory_space<vmem>>, vector<8x128xf32>,
    return
  }
  func.func @transform_0(%arg0: i32) -> (i32, i32) {
    %c0_i32 = arith.constant 0 : i32
    %c0_i32_0 = arith.constant 0 : i32
    return %c0_i32, %arg0 : i32, i32
  }
  func.func @transform_1(%arg0: i32) -> (i32, i32) {
    %c0_i32 = arith.constant 0 : i32
    %c0_i32_0 = arith.constant 0 : i32
    %c0_i32_1 = arith.constant 0 : i32
    return %c0_i32, %c0_i32_0 : i32, i32
  }
  func.func @transform_2(%arg0: i32) -> (i32, i32) {
    %c0_i32 = arith.constant 0 : i32
    %c0_i32_0 = arith.constant 0 : i32
    %c0_i32_1 = arith.constant 0 : i32
    return %c0_i32, %c0_i32_0 : i32, i32
  }
  func.func @transform_3(%arg0: i32) -> (i32, i32) {
    %c0_i32 = arith.constant 0 : i32
    %c0_i32_0 = arith.constant 0 : i32
    %c0_i32_1 = arith.constant 0 : i32
    return %c0_i32, %c0_i32_0 : i32, i32
  }
  func.func @transform_4(%arg0: i32) -> (i32, i32) {
    %c0_i32 = arith.constant 0 : i32
    %c0_i32_0 = arith.constant 0 : i32
    %c0_i32_1 = arith.constant 0 : i32
    return %c0_i32, %c0_i32_0 : i32, i32
  }
  func.func @transform_5(%arg0: i32) -> (i32, i32) {
    %c0_i32 = arith.constant 0 : i32
    %c0_i32_0 = arith.constant 0 : i32
    %c0_i32_1 = arith.constant 0 : i32
    return %c0_i32, %c0_i32_0 : i32, i32
  }
  func.func @transform_6(%arg0: i32) -> (i32, i32) {
    %c0_i32 = arith.constant 0 : i32
    %c0_i32_0 = arith.constant 0 : i32
    %c0_i32_1 = arith.constant 0 : i32
    return %c0_i32, %c0_i32_0 : i32, i32
  }
  func.func @transform_7(%arg0: i32) -> (i32, i32) {
    %c0_i32 = arith.constant 0 : i32
    %c0_i32_0 = arith.constant 0 : i32
    return %c0_i32, %arg0 : i32, i32
  }
}

</mosaic_0001>

<llo_original>
// kernel: tpu_custom_call.1
$region0: #{tpu_custom_call.1}
  #allocation0 [shape = 'u32[]', space=smem, size = 0x4, offset = 0x4, fixed_abs, tag = 'smem constant byte address 0x4 - core index']
  #allocation1 [shape = 'u32[72,128]{1,0:T(1,128)}', space=vmem, size = 0x9000, scoped, tag = 'internal scratch']
  %s0 = inlined_call_operand.hbm [shape: f32[16,256], index: 0, kind: input, shape index: {}]
  %s1 = inlined_call_operand.vmem [shape: bf16[16,48], index: 1, kind: input, shape index: {}]
  %s2 = inlined_call_operand.vmem [shape: bf16[8,48], index: 2, kind: input, shape index: {}]
  %s3 = inlined_call_operand.vmem [shape: f32[16,1], index: 3, kind: input, shape index: {}]
  %s4 = inlined_call_operand.vmem [shape: f32[8,1], index: 4, kind: input, shape index: {}]
  %s5 = inlined_call_operand.vmem [shape: bf16[8,16], index: 5, kind: input, shape index: {}]
  %s6 = inlined_call_operand.vmem [shape: f32[8,1], index: 6, kind: input, shape index: {}]
  %s7 = inlined_call_operand.hbm [shape: f32[8,256], index: 7, kind: output, shape index: {}]
  %s8 = sld [smem:[#allocation0]]
  $region65: #{tpu_custom_call.1} parent=0
    _
  %s10 = ssub.s32 1, %s8
  %s11 = scalar_select 0, %s10, %s8
  $region1: #{tpu_custom_call.1} parent=0
    #allocation2 [shape = 'u8[16384]{0}', space=vmem, size = 0x4000, scoped, tag = 'input window, operand 0']
    #allocation3 [shape = 's32[2]{0}', space=sflag, size = 0x8, scoped, tag = 'scoped memory for tpu_custom_call.1']
    #allocation4 [shape = 's32[2]{0}', space=sflag, size = 0x8, scoped, tag = 'scoped memory for tpu_custom_call.1']
    #allocation5 [shape = 'u8[8192]{0}', space=vmem, size = 0x2000, scoped, tag = 'output window, operand 0']
    %12 = vsyncpa [#allocation3], 0
    %s13 = scalar_lea.sflag [#allocation3], 1
    %14 = vsyncpa %s13, 0
    %15 = vsyncpa [#allocation4], 0
    %s16 = scalar_lea.sflag [#allocation4], 1
    %17 = vsyncpa %s16, 0
    loop: start=0, step=1, limit=4
    $region2: #{tpu_custom_call.1} parent=1 // loop_pre_header
      _
    $region3: #{tpu_custom_call.1} parent=1 // loop_header
      %s19 = sphi 0, %s23
      %p20 = scmp.ge.s32.totalorder %s19, 4
      %s29 = sphi 0, %s31
      %s32 = sphi 0, %s29
      %s33 = sphi 0, %s32
      %s49 = sphi 0, %s33
      %s53 = sphi 0, %s53
      %s55 = sphi 0, %s53
      %s56 = sphi 0, %s55
      %s70 = sphi 0, %s56
      %s74 = sphi 0, %s74
      %s76 = sphi 0, %s74
      %s77 = sphi 0, %s76
      %s91 = sphi 0, %s77
      %s95 = sphi 0, %s95
      %s97 = sphi 0, %s95
      %s98 = sphi 0, %s97
      %s112 = sphi 0, %s98
      %s116 = sphi 0, %s116
      %s118 = sphi 0, %s116
      %s119 = sphi 0, %s118
      %s133 = sphi 0, %s119
      %s137 = sphi 0, %s137
      %s139 = sphi 0, %s137
      %s140 = sphi 0, %s139
      %s154 = sphi 0, %s140
      %s158 = sphi 0, %s158
      %s160 = sphi 0, %s158
      %s161 = sphi 0, %s160
      %s175 = sphi 0, %s161
      %s181 = sphi 0, %s183
      %s184 = sphi 0, %s181
      %s185 = sphi 0, %s184
      %s201 = sphi 0, %s185
    $region4: #{tpu_custom_call.1} parent=1 // loop_header_branch
      %22 = sbr.rel (%p20) target = $region8
    $region5: #{tpu_custom_call.1} parent=1 // loop_body
      %s24 = ssub.s32 %s19, 1
      %s25 = ssub.s32 %s19, 2
      %s26 = sadd.s32 %s19, 1
      %s27 = ssub.s32 %s19, %s26
      %p28 = scmp.eq.s32.totalorder %s27, 0
      %s30 = sadd.s32 %s29, 1
      %s31 = scalar_select %p28, %s29, %s30
      %p34 = pneg %p28
      %p35 = scmp.eq.s32.totalorder %s19, 1
      %p36 = por %p34, %p35
      %p37 = scmp.ne.s32.totalorder %s29, %s32
      %p38 = scmp.eq.s32.totalorder %s19, 0
      %p39 = por %p37, %p38
      %p40 = scmp.ne.s32.totalorder %s29, %s32
      %p41 = scmp.eq.s32.totalorder %s24, 1
      %p42 = por %p40, %p41
      %p43 = scmp.ne.s32.totalorder %s32, %s33
      %p44 = scmp.eq.s32.totalorder %s24, 0
      %p45 = por %p43, %p44
      %p46 = scmp.ne.s32.totalorder %s32, %s33
      %p47 = scmp.eq.s32.totalorder %s25, 1
      %p48 = por %p46, %p47
      %p50 = scmp.ne.s32.totalorder %s33, %s49
      %p51 = scmp.eq.s32.totalorder %s25, 0
      %p52 = por %p50, %p51
      %s54 = sadd.s32 %s53, 1
      %p57 = scmp.eq.s32.totalorder %s19, 1
      %p58 = scmp.ne.s32.totalorder %s53, %s55
      %p59 = scmp.eq.s32.totalorder %s19, 0
      %p60 = por %p58, %p59
      %p61 = scmp.ne.s32.totalorder %s53, %s55
      %p62 = scmp.eq.s32.totalorder %s24, 1
      %p63 = por %p61, %p62
      %p64 = scmp.ne.s32.totalorder %s55, %s56
      %p65 = scmp.eq.s32.totalorder %s24, 0
      %p66 = por %p64, %p65
      %p67 = scmp.ne.s32.totalorder %s55, %s56
      %p68 = scmp.eq.s32.totalorder %s25, 1
      %p69 = por %p67, %p68
      %p71 = scmp.ne.s32.totalorder %s56, %s70
      %p72 = scmp.eq.s32.totalorder %s25, 0
      %p73 = por %p71, %p72
      %s75 = sadd.s32 %s74, 1
      %p78 = scmp.eq.s32.totalorder %s19, 1
      %p79 = scmp.ne.s32.totalorder %s74, %s76
      %p80 = scmp.eq.s32.totalorder %s19, 0
      %p81 = por %p79, %p80
      %p82 = scmp.ne.s32.totalorder %s74, %s76
      %p83 = scmp.eq.s32.totalorder %s24, 1
      %p84 = por %p82, %p83
      %p85 = scmp.ne.s32.totalorder %s76, %s77
      %p86 = scmp.eq.s32.totalorder %s24, 0
      %p87 = por %p85, %p86
      %p88 = scmp.ne.s32.totalorder %s76, %s77
      %p89 = scmp.eq.s32.totalorder %s25, 1
      %p90 = por %p88, %p89
      %p92 = scmp.ne.s32.totalorder %s77, %s91
      %p93 = scmp.eq.s32.totalorder %s25, 0
      %p94 = por %p92, %p93
      %s96 = sadd.s32 %s95, 1
      %p99 = scmp.eq.s32.totalorder %s19, 1
      %p100 = scmp.ne.s32.totalorder %s95, %s97
      %p101 = scmp.eq.s32.totalorder %s19, 0
      %p102 = por %p100, %p101
      %p103 = scmp.ne.s32.totalorder %s95, %s97
      %p104 = scmp.eq.s32.totalorder %s24, 1
      %p105 = por %p103, %p104
      %p106 = scmp.ne.s32.totalorder %s97, %s98
      %p107 = scmp.eq.s32.totalorder %s24, 0
      %p108 = por %p106, %p107
      %p109 = scmp.ne.s32.totalorder %s97, %s98
      %p110 = scmp.eq.s32.totalorder %s25, 1
      %p111 = por %p109, %p110
      %p113 = scmp.ne.s32.totalorder %s98, %s112
      %p114 = scmp.eq.s32.totalorder %s25, 0
      %p115 = por %p113, %p114
      %s117 = sadd.s32 %s116, 1
      %p120 = scmp.eq.s32.totalorder %s19, 1
      %p121 = scmp.ne.s32.totalorder %s116, %s118
      %p122 = scmp.eq.s32.totalorder %s19, 0
      %p123 = por %p121, %p122
      %p124 = scmp.ne.s32.totalorder %s116, %s118
      %p125 = scmp.eq.s32.totalorder %s24, 1
      %p126 = por %p124, %p125
      %p127 = scmp.ne.s32.totalorder %s118, %s119
      %p128 = scmp.eq.s32.totalorder %s24, 0
      %p129 = por %p127, %p128
      %p130 = scmp.ne.s32.totalorder %s118, %s119
      %p131 = scmp.eq.s32.totalorder %s25, 1
      %p132 = por %p130, %p131
      %p134 = scmp.ne.s32.totalorder %s119, %s133
      %p135 = scmp.eq.s32.totalorder %s25, 0
      %p136 = por %p134, %p135
      %s138 = sadd.s32 %s137, 1
      %p141 = scmp.eq.s32.totalorder %s19, 1
      %p142 = scmp.ne.s32.totalorder %s137, %s139
      %p143 = scmp.eq.s32.totalorder %s19, 0
      %p144 = por %p142, %p143
      %p145 = scmp.ne.s32.totalorder %s137, %s139
      %p146 = scmp.eq.s32.totalorder %s24, 1
      %p147 = por %p145, %p146
      %p148 = scmp.ne.s32.totalorder %s139, %s140
      %p149 = scmp.eq.s32.totalorder %s24, 0
      %p150 = por %p148, %p149
      %p151 = scmp.ne.s32.totalorder %s139, %s140
      %p152 = scmp.eq.s32.totalorder %s25, 1
      %p153 = por %p151, %p152
      %p155 = scmp.ne.s32.totalorder %s140, %s154
      %p156 = scmp.eq.s32.totalorder %s25, 0
      %p157 = por %p155, %p156
      %s159 = sadd.s32 %s158, 1
      %p162 = scmp.eq.s32.totalorder %s19, 1
      %p163 = scmp.ne.s32.totalorder %s158, %s160
      %p164 = scmp.eq.s32.totalorder %s19, 0
      %p165 = por %p163, %p164
      %p166 = scmp.ne.s32.totalorder %s158, %s160
      %p167 = scmp.eq.s32.totalorder %s24, 1
      %p168 = por %p166, %p167
      %p169 = scmp.ne.s32.totalorder %s160, %s161
      %p170 = scmp.eq.s32.totalorder %s24, 0
      %p171 = por %p169, %p170
      %p172 = scmp.ne.s32.totalorder %s160, %s161
      %p173 = scmp.eq.s32.totalorder %s25, 1
      %p174 = por %p172, %p173
      %p176 = scmp.ne.s32.totalorder %s161, %s175
      %p177 = scmp.eq.s32.totalorder %s25, 0
      %p178 = por %p176, %p177
      %s179 = ssub.s32 %s19, %s26
      %p180 = scmp.eq.s32.totalorder %s179, 0
      %s182 = sadd.s32 %s181, 1
      %s183 = scalar_select %p180, %s181, %s182
      %p186 = pneg %p180
      %p187 = scmp.eq.s32.totalorder %s19, 1
      %p188 = por %p186, %p187
      %p189 = scmp.ne.s32.totalorder %s181, %s184
      %p190 = scmp.eq.s32.totalorder %s19, 0
      %p191 = por %p189, %p190
      %p192 = scmp.ne.s32.totalorder %s181, %s184
      %p193 = scmp.eq.s32.totalorder %s24, 1
      %p194 = por %p192, %p193
      %p195 = scmp.ne.s32.totalorder %s184, %s185
      %p196 = scmp.eq.s32.totalorder %s24, 0
      %p197 = por %p195, %p196
      %p198 = scmp.ne.s32.totalorder %s184, %s185
      %p199 = scmp.eq.s32.totalorder %s25, 1
      %p200 = por %p198, %p199
      %p202 = scmp.ne.s32.totalorder %s185, %s201
      %p203 = scmp.eq.s32.totalorder %s25, 0
      %p204 = por %p202, %p203
      %p205 = scmp.le.s32.totalorder 1, %s19
      %p206 = scmp.lt.s32.totalorder %s19, 3
      %p207 = pnand %p205, %p206
      %p208 = pneg %p207
      // Predicated region
      $region9: #{tpu_custom_call.1} parent=5 // pred_check
        _
      $region10: #{tpu_custom_call.1} parent=5 // pred_check_branch
        %210 = sbr.rel (%p207) target = $region12
      $region11: #{tpu_custom_call.1} parent=5 // pred_region
        %s211 = ssub.s32 %s19, 1
        // Predicated region
        $region13: #{tpu_custom_call.1} parent=11 // pred_check
          %p212 = pneg %p66
        $region14: #{tpu_custom_call.1} parent=11 // pred_check_branch
          %214 = sbr.rel (%p212) target = $region16
        $region15: #{tpu_custom_call.1} parent=11 // pred_region
          _
        $region16: #{tpu_custom_call.1} parent=11 // pred_fallthru
          _
        // Predicated region
        $region17: #{tpu_custom_call.1} parent=11 // pred_check
          %p215 = pneg %p87
        $region18: #{tpu_custom_call.1} parent=11 // pred_check_branch
          %217 = sbr.rel (%p215) target = $region20
        $region19: #{tpu_custom_call.1} parent=11 // pred_region
          _
        $region20: #{tpu_custom_call.1} parent=11 // pred_fallthru
          _
        // Predicated region
        $region21: #{tpu_custom_call.1} parent=11 // pred_check
          %p218 = pneg %p108
        $region22: #{tpu_custom_call.1} parent=11 // pred_check_branch
          %220 = sbr.rel (%p218) target = $region24
        $region23: #{tpu_custom_call.1} parent=11 // pred_region
          _
        $region24: #{tpu_custom_call.1} parent=11 // pred_fallthru
          _
        // Predicated region
        $region25: #{tpu_custom_call.1} parent=11 // pred_check
          %p221 = pneg %p129
        $region26: #{tpu_custom_call.1} parent=11 // pred_check_branch
          %223 = sbr.rel (%p221) target = $region28
        $region27: #{tpu_custom_call.1} parent=11 // pred_region
          _
        $region28: #{tpu_custom_call.1} parent=11 // pred_fallthru
          _
        // Predicated region
        $region29: #{tpu_custom_call.1} parent=11 // pred_check
          %p224 = pneg %p150
        $region30: #{tpu_custom_call.1} parent=11 // pred_check_branch
          %226 = sbr.rel (%p224) target = $region32
        $region31: #{tpu_custom_call.1} parent=11 // pred_region
          _
        $region32: #{tpu_custom_call.1} parent=11 // pred_fallthru
          _
        // Predicated region
        $region33: #{tpu_custom_call.1} parent=11 // pred_check
          %p227 = pneg %p171
        $region34: #{tpu_custom_call.1} parent=11 // pred_check_branch
          %229 = sbr.rel (%p227) target = $region36
        $region35: #{tpu_custom_call.1} parent=11 // pred_region
          _
        $region36: #{tpu_custom_call.1} parent=11 // pred_fallthru
          _
      $region12: #{tpu_custom_call.1} parent=5 // pred_fallthru
        _
      %p230 = scmp.lt.s32.totalorder %s19, 2
      // Predicated region
      $region37: #{tpu_custom_call.1} parent=5 // pred_check
        %p231 = pneg %p230
      $region38: #{tpu_custom_call.1} parent=5 // pred_check_branch
        %233 = sbr.rel (%p231) target = $region40
      $region39: #{tpu_custom_call.1} parent=5 // pred_region
        // Predicated region
        $region41: #{tpu_custom_call.1} parent=39 // pred_check
          %p234 = pneg %p39
        $region42: #{tpu_custom_call.1} parent=39 // pred_check_branch
          %236 = sbr.rel (%p234) target = $region44
        $region43: #{tpu_custom_call.1} parent=39 // pred_region
          %s237 = sand.u32 %s29, 1
          %s238 = scalar_lea.sflag [#allocation3], %s237
          %s239 = sand.u32 %s29, 1
          %s240 = smul.addr %s239, 16
          %s241 = scalar_lea.vmem [#allocation2], %s240
          %243 = vsyncadd %s238, 0
          %s244 = smul.addr %s19, 8
          %s245 = scalar_lea.hbm %s0, %s244
          %s246 = sshll.u32 %s245, 4
          %s247 = int_to_ptr.hbm [resolvable:$true] %s246
          %s248 = sshll.u32 %s241, 4
          %s249 = int_to_ptr.vmem [resolvable:$true] %s248
          %254 = dma.hbm_to_vmem [thread:$0]  %s247, 256, %s249, %s238, 256, 128, 8
        $region44: #{tpu_custom_call.1} parent=39 // pred_fallthru
          _
      $region40: #{tpu_custom_call.1} parent=5 // pred_fallthru
        _
      %p255 = scmp.le.s32.totalorder 1, %s19
      %p256 = scmp.lt.s32.totalorder %s19, 3
      %p257 = pnand %p255, %p256
      %p258 = pneg %p257
      // Predicated region
      $region45: #{tpu_custom_call.1} parent=5 // pred_check
        _
      $region46: #{tpu_custom_call.1} parent=5 // pred_check_branch
        %260 = sbr.rel (%p257) target = $region48
      $region47: #{tpu_custom_call.1} parent=5 // pred_region
        %s261 = ssub.s32 %s19, 1
        %s262 = sand.u32 %s32, 1
        %s263 = scalar_lea.sflag [#allocation3], %s262
        %s264 = sand.u32 %s32, 1
        %s265 = smul.addr %s264, 16
        %s266 = scalar_lea.vmem [#allocation2], %s265
        // Predicated region
        $region49: #{tpu_custom_call.1} parent=47 // pred_check
          %p267 = pneg %p45
        $region50: #{tpu_custom_call.1} parent=47 // pred_check_branch
          %269 = sbr.rel (%p267) target = $region52
        $region51: #{tpu_custom_call.1} parent=47 // pred_region
          %271 = dma.done %s263, 256
        $region52: #{tpu_custom_call.1} parent=47 // pred_fallthru
          _
        %s272 = sand.u32 %s32, 1
        %s273 = scalar_lea.sflag [#allocation3], %s272
        %s274 = sand.u32 %s32, 1
        %s275 = smul.addr %s274, 16
        %s276 = scalar_lea.vmem [#allocation2], %s275
        %p277 = pneg %p45
        %p278 = pneg %p42
        %p279 = pneg %p66
        %p280 = pneg %p63
        %p281 = pneg %p87
        %p282 = pneg %p84
        %p283 = pneg %p108
        %p284 = pneg %p105
        %p285 = pneg %p129
        %p286 = pneg %p126
        %p287 = pneg %p150
        %p288 = pneg %p147
        %p289 = pneg %p171
        %p290 = pneg %p168
        %p291 = pneg %p197
        %p292 = pneg %p194
        %s293 = sand.u32 %s184, 1
        %s294 = scalar_lea.sflag [#allocation4], %s293
        %s295 = sand.u32 %s184, 1
        %s296 = smul.addr %s295, 8
        %s297 = scalar_lea.vmem [#allocation5], %s296
        %v299 = vld [vmem:[%s266] sm:$0xff]
        %v300 = vld [vmem:[%s266 + $0x8] sm:$0xff]
        %v301 = vlaneseq
        %v302 = vand.u32 %v301, 127
        %v303 = vld [vmem:[%s1] sm:$0xf]
        %v304 = vld [vmem:[%s1 + $0x4] sm:$0xf]
        %vm305 = vcmp.lt.s32.totalorder %v302, 4
        %306 = vrot.lane.b32.xlu0 %v299, 4
        %v307 = vpop.permute.xlu0 %306
        %308 = vrot.lane.b32.xlu0 %v300, 4
        %v309 = vpop.permute.xlu0 %308
        %v310 = vsel %vm305, 1, 0
        %vm311 = vcmp.eq.s32.totalorder %v310, 1
        %v312 = vsel %vm311, 0.0, %v307
        %v313 = vsel %vm311, 0.0, %v309
        %vm314 = vcmp.lt.s32.totalorder %v302, 2
        %315 = vrot.lane.b32.xlu0 %v299, 2
        %v316 = vpop.permute.xlu0 %315
        %317 = vrot.lane.b32.xlu0 %v300, 2
        %v318 = vpop.permute.xlu0 %317
        %v319 = vsel %vm314, 1, 0
        %vm320 = vcmp.eq.s32.totalorder %v319, 1
        %v321 = vsel %vm320, 0.0, %v316
        %v322 = vsel %vm320, 0.0, %v318
        %v323 = vpack.c.bf16 %v313, %v312
        %v324 = vpack.c.bf16 %v322, %v321
        %v325 = vpack.c.bf16 %v300, %v299
        %v326 = vld [vmem:[%s3] sm:$0xff]
        %v327 = vld [vmem:[%s3 + $0x8] sm:$0xff]
        %329 = vset.pattern.permute.xlu0 0
        %330 = vperm.xlu0 %329, %v326
        %v331 = vpop.permute.xlu0 %330
        %334 = vset.pattern.permute.xlu0 0
        %335 = vperm.xlu0 %334, %v327
        %v336 = vpop.permute.xlu0 %335
        %v340 = vunpack.c.l.b16 %v303
        %v341 = vunpack.c.l.b16 %v304
        %v342 = vpack.c.b16 %v341, %v340
        %vm343 = vcmask 392192
        %v345 = vsel %vm343, %v342, 0
        %347 = vmatpush.bf16.msra.mxu0 0
        %348 = vmatpush.bf16.msra.mxu0 0
        %349 = vmatpush.bf16.msra.mxu0 0
        %350 = vmatpush.bf16.msra.mxu0 0
        %351 = vmatpush.bf16.msra.mxu0 0
        %352 = vmatpush.bf16.msra.mxu0 %v325
        %353 = vmatpush.bf16.msra.mxu0 %v324
        %354 = vmatpush.bf16.msra.mxu0 %v323
        %355 = vmatmul.bf16.gmra.mxu0 %v345
        %v356 = vpop.f32.mrf.mxu0
        %v357 = vadd.f32 %v331, %v356
        %v358 = vpop.f32.mrf.mxu0
        %v359 = vadd.f32 %v336, %v358
        %360 = vdwg.mxu0
        %v361 = vmax.f32 %v357, 0.0
        %v362 = vmax.f32 %v359, 0.0
        %v363 = vld [vmem:[%s2] sm:$0xf]
        %364 = vrot.lane.b32.xlu0 %v361, 4
        %v365 = vpop.permute.xlu0 %364
        %366 = vrot.lane.b32.xlu0 %v362, 4
        %v367 = vpop.permute.xlu0 %366
        %v368 = vsel %vm311, 0.0, %v365
        %v369 = vsel %vm311, 0.0, %v367
        %370 = vrot.lane.b32.xlu0 %v361, 2
        %v371 = vpop.permute.xlu0 %370
        %372 = vrot.lane.b32.xlu0 %v362, 2
        %v373 = vpop.permute.xlu0 %372
        %v374 = vsel %vm320, 0.0, %v371
        %v375 = vsel %vm320, 0.0, %v373
        %v376 = vpack.c.bf16 %v369, %v368
        %v377 = vpack.c.bf16 %v375, %v374
        %v378 = vpack.c.bf16 %v362, %v361
        %v379 = vld [vmem:[%s4] sm:$0xff]
        %381 = vset.pattern.permute.xlu0 0
        %382 = vperm.xlu0 %381, %v379
        %v383 = vpop.permute.xlu0 %382
        %v386 = vsel %vm343, %v363, 0
        %388 = vmatpush.bf16.msra.mxu0 0
        %389 = vmatpush.bf16.msra.mxu0 0
        %390 = vmatpush.bf16.msra.mxu0 0
        %391 = vmatpush.bf16.msra.mxu0 0
        %392 = vmatpush.bf16.msra.mxu0 0
        %393 = vmatpush.bf16.msra.mxu0 %v378
        %394 = vmatpush.bf16.msra.mxu0 %v377
        %395 = vmatpush.bf16.msra.mxu0 %v376
        %396 = vmatmul.bf16.gmra.mxu0 %v386
        %v397 = vpop.f32.mrf.mxu0
        %v398 = vadd.f32 %v383, %v397
        %v399 = vpop.f32.mrf.mxu0
        %400 = vdwg.mxu0
        %v401 = vmax.f32 %v398, 0.0
        %v402 = vld [vmem:[%s5] sm:$0xf]
        %v403 = vld [vmem:[%s6] sm:$0xff]
        %405 = vset.pattern.permute.xlu0 0
        %406 = vperm.xlu0 %405, %v403
        %v407 = vpop.permute.xlu0 %406
        %vm409 = vcmask 130048
        %v411 = vsel %vm409, %v402, 0
        %413 = vmatpush.bf16.msra.mxu0 0
        %414 = vmatpush.bf16.msra.mxu0 0
        %415 = vmatpush.bf16.msra.mxu0 0
        %416 = vmatpush.bf16.msra.mxu0 0
        %417 = vmatpush.bf16.msra.mxu0 0
        %418 = vmatpush.bf16.msra.mxu0 0
        %419 = vmatpush.bf16.msra.mxu0 0
        %420 = vmatpush.bf16.msra.mxu0 %v325
        %421 = vmatmul.bf16.gmra.mxu0 %v411
        %v422 = vpop.f32.mrf.mxu0
        %v423 = vadd.f32 %v407, %v422
        %v424 = vpop.f32.mrf.mxu0
        %425 = vdwg.mxu0
        %v426 = vadd.f32 %v401, %v423
        %v427 = vmax.f32 %v426, 0.0
        %428 = vst [vmem:[%s297] sm:$0xff] %v427
        %s429 = sand.u32 %s184, 1
        %s430 = scalar_lea.sflag [#allocation4], %s429
        %s431 = sand.u32 %s184, 1
        %s432 = smul.addr %s431, 8
        %s433 = scalar_lea.vmem [#allocation5], %s432
        // Predicated region
        $region53: #{tpu_custom_call.1} parent=47 // pred_check
          %p434 = pneg %p194
        $region54: #{tpu_custom_call.1} parent=47 // pred_check_branch
          %436 = sbr.rel (%p434) target = $region56
        $region55: #{tpu_custom_call.1} parent=47 // pred_region
          %438 = vsyncadd %s430, 0
          %s439 = smul.addr %s24, 8
          %s440 = scalar_lea.hbm %s7, %s439
          %s442 = sshll.u32 %s433, 4
          %s443 = int_to_ptr.vmem [resolvable:$true] %s442
          %s444 = sshll.u32 %s440, 4
          %s445 = int_to_ptr.hbm [resolvable:$true] %s444
          %447 = dma.vmem_to_hbm [thread:$0]  %s443, 128, %s445, %s430
        $region56: #{tpu_custom_call.1} parent=47 // pred_fallthru
          _
      $region48: #{tpu_custom_call.1} parent=5 // pred_fallthru
        _
      %p448 = scmp.le.s32.totalorder 2, %s19
      // Predicated region
      $region57: #{tpu_custom_call.1} parent=5 // pred_check
        %p449 = pneg %p448
      $region58: #{tpu_custom_call.1} parent=5 // pred_check_branch
        %451 = sbr.rel (%p449) target = $region60
      $region59: #{tpu_custom_call.1} parent=5 // pred_region
        %s452 = ssub.s32 %s19, 2
        // Predicated region
        $region61: #{tpu_custom_call.1} parent=59 // pred_check
          %p453 = pneg %p200
        $region62: #{tpu_custom_call.1} parent=59 // pred_check_branch
          %455 = sbr.rel (%p453) target = $region64
        $region63: #{tpu_custom_call.1} parent=59 // pred_region
          %s456 = sand.u32 %s185, 1
          %s457 = scalar_lea.sflag [#allocation4], %s456
          %s458 = sand.u32 %s185, 1
          %s459 = smul.addr %s458, 8
          %s460 = scalar_lea.vmem [#allocation5], %s459
          %462 = dma.done %s457, 128
        $region64: #{tpu_custom_call.1} parent=59 // pred_fallthru
          _
      $region60: #{tpu_custom_call.1} parent=5 // pred_fallthru
        _
    $region6: #{tpu_custom_call.1} parent=1 // loop_footer
      %s23 = sadd.s32 1, %s19
    $region7: #{tpu_custom_call.1} parent=1 // loop_footer_branch
      %18 = sbr.rel target = $region3
    $region8: #{tpu_custom_call.1} parent=1 // loop_exit
      _
    %463 = vsyncpa [#allocation3], 1
    %s464 = scalar_lea.sflag [#allocation3], 1
    %465 = vsyncpa %s464, 1
    %466 = vsyncpa [#allocation4], 1
    %s467 = scalar_lea.sflag [#allocation4], 1
    %468 = vsyncpa %s467, 1

</llo_original>
